<compile_context>
chip_gen: v7x
topology: tpu7x:2x2x1
jax: 0.10.0
libtpu: 0.0.40
codegen_flags: <defaults>
</compile_context>

<pallas_src>
import jax
import jax.numpy as jnp
import numpy as np
from jax.experimental import pallas as pl
from jax.experimental.pallas import tpu as pltpu

_SCATTER_WINDOW = 8  # max in-flight per-row DMAs on the scatter path (power of 2)


def _make_kv_update_kernel(num_pos, static_contiguous):
    """Build a kernel specialized on static num_pos and (optionally) on a static
    contiguity decision (True / False / None = decide at runtime from prefetch)."""
    W = _SCATTER_WINDOW

    def kernel(pos_ref, contig_ref,            # SMEM scalar prefetch
               k_cache_hbm, v_cache_hbm,       # ANY/HBM, aliased to outputs; never read
               k_val_hbm, v_val_hbm,           # ANY/HBM new rows [B, num_pos, H*D]
               k_out_hbm, v_out_hbm,           # ANY/HBM outputs (same buffers as caches)
               sems):                          # DMA semaphores [W, 2]
        del k_cache_hbm, v_cache_hbm           # in-place via aliasing; no destination reads

        def run_slab():
            # Positions are contiguous: one dense DMA per cache covering all rows.
            start = pos_ref[0]
            ck = pltpu.make_async_copy(
                k_val_hbm, k_out_hbm.at[:, pl.ds(start, num_pos)], sems.at[0, 0])
            cv = pltpu.make_async_copy(
                v_val_hbm, v_out_hbm.at[:, pl.ds(start, num_pos)], sems.at[0, 1])
            ck.start(); cv.start()
            ck.wait(); cv.wait()

        def _start(i):
            slot = i & (W - 1)
            p = pos_ref[i]
            pltpu.make_async_copy(k_val_hbm.at[:, pl.ds(i, 1)],
                                  k_out_hbm.at[:, pl.ds(p, 1)], sems.at[slot, 0]).start()
            pltpu.make_async_copy(v_val_hbm.at[:, pl.ds(i, 1)],
                                  v_out_hbm.at[:, pl.ds(p, 1)], sems.at[slot, 1]).start()

        def _wait(slot):
            # Only the semaphore and the transfer size matter for wait(); use
            # fixed slices of the same shape as the started copies.
            pltpu.make_async_copy(k_val_hbm.at[:, pl.ds(0, 1)],
                                  k_out_hbm.at[:, pl.ds(0, 1)], sems.at[slot, 0]).wait()
            pltpu.make_async_copy(v_val_hbm.at[:, pl.ds(0, 1)],
                                  v_out_hbm.at[:, pl.ds(0, 1)], sems.at[slot, 1]).wait()

        def run_scatter():
            # Bounded in-flight window: start W copies, then (wait oldest, start
            # next), then drain.  Keeps enough DMAs in flight to hide HBM latency
            # without scaling semaphores/descriptors with num_pos.
            n_prime = min(W, num_pos)

            @pl.loop(0, n_prime)
            def _(i):
                _start(i)

            if num_pos > W:
                @pl.loop(W, num_pos)
                def _(i):
                    _wait(i & (W - 1))
                    _start(i)

            @pl.loop(num_pos - n_prime, num_pos)
            def _(i):
                _wait(i & (W - 1))

        if static_contiguous is True or num_pos == 1:
            run_slab()
        elif static_contiguous is False:
            run_scatter()
        else:
            is_contig = contig_ref[0] != 0
            pl.when(is_contig)(run_slab)
            pl.when(jnp.logical_not(is_contig))(run_scatter)

    return kernel


def kv_cache_update(k_cache, v_cache, input_pos, k_val, v_val, contiguous=None):
    """Pallas equivalent of KVCache.forward: cache.index_copy_(1, input_pos, val).

    `contiguous` (static): True/False to compile only the slab/scatter branch when
    the call site knows; None computes the flag in the wrapper and decides at runtime.
    """
    B, S, H, D = k_cache.shape
    num_pos = input_pos.shape[0]
    HD = H * D
    assert k_val.shape == (B, num_pos, H, D) and v_val.shape == (B, num_pos, H, D)
    assert k_val.dtype == k_cache.dtype and v_val.dtype == v_cache.dtype

    if num_pos == 0:                           # empty update: nothing to do
        return k_cache, v_cache

    # Lane-dense collapse of (H, D) -> H*D; trailing dims are contiguous, so the
    # reshape (and the one undoing it) is free.
    k_cache_r = k_cache.reshape(B, S, HD)
    v_cache_r = v_cache.reshape(B, S, HD)
    k_val_r = k_val.reshape(B, num_pos, HD)
    v_val_r = v_val.reshape(B, num_pos, HD)

    input_pos = input_pos.astype(jnp.int32)
    if contiguous is None and num_pos > 1:
        # One vectorized reduction in the wrapper instead of a serialized in-kernel scan.
        contig_flag = jnp.all(input_pos[1:] == input_pos[:-1] + 1).astype(jnp.int32).reshape(1)
    else:
        contig_flag = jnp.ones((1,), jnp.int32)

    bytes_accessed = 2 * (k_val_r.size * np.dtype(k_val.dtype).itemsize
                          + v_val_r.size * np.dtype(v_val.dtype).itemsize)

    grid_spec = pltpu.PrefetchScalarGridSpec(
        num_scalar_prefetch=2,
        grid=(1,),
        in_specs=[
            pl.BlockSpec(memory_space=pl.ANY),   # k_cache: aliased, never DMA'd in
            pl.BlockSpec(memory_space=pl.ANY),   # v_cache: aliased, never DMA'd in
            pl.BlockSpec(memory_space=pl.ANY),   # k_val
            pl.BlockSpec(memory_space=pl.ANY),   # v_val
        ],
        out_specs=[
            pl.BlockSpec(memory_space=pl.ANY),   # updated k cache (same HBM buffer)
            pl.BlockSpec(memory_space=pl.ANY),   # updated v cache (same HBM buffer)
        ],
        scratch_shapes=[pltpu.SemaphoreType.DMA((_SCATTER_WINDOW, 2))],
    )

    kernel = _make_kv_update_kernel(num_pos, contiguous)

    k_out, v_out = pl.pallas_call(
        kernel,
        grid_spec=grid_spec,
        out_shape=(
            jax.ShapeDtypeStruct((B, S, HD), k_cache.dtype),
            jax.ShapeDtypeStruct((B, S, HD), v_cache.dtype),
        ),
        # Alias indices count the scalar-prefetch operands: call args are
        # (input_pos, contig_flag, k_cache, v_cache, k_val, v_val) -> 2 is k_cache, 3 is v_cache.
        input_output_aliases={2: 0, 3: 1},
        compiler_params=pltpu.CompilerParams(dimension_semantics=("arbitrary",)),
        cost_estimate=pl.CostEstimate(flops=0, transcendentals=0,
                                      bytes_accessed=int(bytes_accessed)),
    )(input_pos, contig_flag, k_cache_r, v_cache_r, k_val_r, v_val_r)

    return k_out.reshape(B, S, H, D), v_out.reshape(B, S, H, D)


class KVCache:
    """JAX/Pallas mirror of the PyTorch KVCache module (functional cache state)."""

    def __init__(self, batch_size, max_seq_length, n_heads, head_dim, dtype=jnp.float32):
        cache_shape = (batch_size, max_seq_length, n_heads, head_dim)
        # register_buffer('k_cache'/'v_cache', torch.zeros(...), persistent=False)
        # (bf16 caches are supported and halve HBM traffic; f32 kept to match torch default.)
        self.k_cache = jnp.zeros(cache_shape, dtype)
        self.v_cache = jnp.zeros(cache_shape, dtype)
        # Donate the cache buffers so the update is genuinely in-place end to end.
        self._update = jax.jit(kv_cache_update, donate_argnums=(0, 1),
                               static_argnames=("contiguous",))

    def __call__(self, input_pos, k_val, v_val, contiguous=None):
        updated_k, updated_v = self._update(self.k_cache, self.v_cache,
                                            input_pos, k_val, v_val,
                                            contiguous=contiguous)
        self.k_cache, self.v_cache = updated_k, updated_v
        return updated_k, updated_v


if __name__ == "__main__":
    batch, max_seq, n_heads, head_dim = 2, 16, 4, 32
    num_pos = 4

    key = jax.random.PRNGKey(0)
    k1, k2, k3, k4, k5, k6 = jax.random.split(key, 6)
    k_val = jax.random.normal(k1, (batch, num_pos, n_heads, head_dim), jnp.float32)
    v_val = jax.random.normal(k2, (batch, num_pos, n_heads, head_dim), jnp.float32)

    # --- 1) Module path: non-contiguous (unique) positions -> runtime scatter branch.
    input_pos = jnp.array([3, 7, 12, 0], dtype=jnp.int32)
    cache = KVCache(batch, max_seq, n_heads, head_dim)
    k_ref = cache.k_cache.at[:, input_pos].set(k_val)   # pure-JAX reference on pre-update cache
    v_ref = cache.v_cache.at[:, input_pos].set(v_val)
    upd_k, upd_v = cache(input_pos, k_val, v_val)
    jax.block_until_ready((upd_k, upd_v))
    np.testing.assert_allclose(np.asarray(upd_k), np.asarray(k_ref), rtol=0, atol=0)
    np.testing.assert_allclose(np.asarray(upd_v), np.asarray(v_ref), rtol=0, atol=0)

    # --- 2) Raw kernel: contiguous positions (runtime slab fast path) with DISTINCT
    #        sentinel caches, verifying untouched rows survive and the k/v aliasing
    #        (alias-index convention with 2 prefetch operands) is not swapped.
    k_cache0 = jnp.full((batch, max_seq, n_heads, head_dim), 3.0, jnp.float32)
    v_cache0 = jnp.full((batch, max_seq, n_heads, head_dim), -7.0, jnp.float32)
    pos_c = jnp.array([5, 6, 7, 8], dtype=jnp.int32)
    k_val2 = jax.random.normal(k3, (batch, num_pos, n_heads, head_dim), jnp.float32)
    v_val2 = jax.random.normal(k4, (batch, num_pos, n_heads, head_dim), jnp.float32)
    k_exp = k_cache0.at[:, pos_c].set(k_val2)
    v_exp = v_cache0.at[:, pos_c].set(v_val2)
    update_jit = jax.jit(kv_cache_update, static_argnames=("contiguous",))
    k_got, v_got = update_jit(k_cache0, v_cache0, pos_c, k_val2, v_val2)
    jax.block_until_ready((k_got, v_got))
    np.testing.assert_allclose(np.asarray(k_got), np.asarray(k_exp), rtol=0, atol=0)
    np.testing.assert_allclose(np.asarray(v_got), np.asarray(v_exp), rtol=0, atol=0)

    # --- 3) Decode step: single position (num_pos == 1, statically slab-only).
    pos_1 = jnp.array([15], dtype=jnp.int32)
    k_val1, v_val1 = k_val2[:, :1], v_val2[:, :1]
    k_exp1 = k_got.at[:, pos_1].set(k_val1)
    v_exp1 = v_got.at[:, pos_1].set(v_val1)
    k_got1, v_got1 = update_jit(k_got, v_got, pos_1, k_val1, v_val1)
    jax.block_until_ready((k_got1, v_got1))
    np.testing.assert_allclose(np.asarray(k_got1), np.asarray(k_exp1), rtol=0, atol=0)
    np.testing.assert_allclose(np.asarray(v_got1), np.asarray(v_exp1), rtol=0, atol=0)

    # --- 4) Static scatter specialization with num_pos > window (exercises the
    #        bounded in-flight W=8 pipeline: prime / steady-state / drain).
    big_seq, big_pos = 32, 12
    kc_b = jnp.full((batch, big_seq, n_heads, head_dim), 1.5, jnp.float32)
    vc_b = jnp.full((batch, big_seq, n_heads, head_dim), -2.5, jnp.float32)
    pos_b = jnp.array([30, 2, 17, 5, 9, 0, 25, 13, 7, 21, 11, 28], dtype=jnp.int32)  # unique
    kv_b = jax.random.normal(k5, (batch, big_pos, n_heads, head_dim), jnp.float32)
    vv_b = jax.random.normal(k6, (batch, big_pos, n_heads, head_dim), jnp.float32)
    k_exp_b = kc_b.at[:, pos_b].set(kv_b)
    v_exp_b = vc_b.at[:, pos_b].set(vv_b)
    k_got_b, v_got_b = update_jit(kc_b, vc_b, pos_b, kv_b, vv_b, contiguous=False)
    jax.block_until_ready((k_got_b, v_got_b))
    np.testing.assert_allclose(np.asarray(k_got_b), np.asarray(k_exp_b), rtol=0, atol=0)
    np.testing.assert_allclose(np.asarray(v_got_b), np.asarray(v_exp_b), rtol=0, atol=0)

    # --- 5) bf16 caches (dtype-agnostic pure-DMA path; halves HBM bytes moved).
    cache_bf = KVCache(batch, max_seq, n_heads, head_dim, dtype=jnp.bfloat16)
    k_val_bf = k_val.astype(jnp.bfloat16)
    v_val_bf = v_val.astype(jnp.bfloat16)
    k_ref_bf = cache_bf.k_cache.at[:, input_pos].set(k_val_bf)
    v_ref_bf = cache_bf.v_cache.at[:, input_pos].set(v_val_bf)
    k_bf, v_bf = cache_bf(input_pos, k_val_bf, v_val_bf)
    jax.block_until_ready((k_bf, v_bf))
    np.testing.assert_array_equal(np.asarray(k_bf), np.asarray(k_ref_bf))
    np.testing.assert_array_equal(np.asarray(v_bf), np.asarray(v_ref_bf))

    print("KERNEL_OK")
</pallas_src>

<mosaic_0001>
module attributes {stable_mosaic.version = 11 : i64} {
  func.func @kernel(%arg0: i32, %arg1: memref<4xi32, #tpu.memory_space<smem>>, %arg2: memref<1xi32, #tpu.memory_space<smem>>, %arg3: memref<2x16x128xf32, #tpu.memory_space<any>>, %arg4: memref<2x16x128xf32, #tpu.memory_space<any>>, %arg5: memref<2x4x128xf32, #tpu.memory_space<any>>, %arg6: memref<2x4x128xf32, #tpu.memory_space<any>>, %arg7: memref<2x16x128xf32, #tpu.memory_space<any>>, %arg8: memref<2x16x128xf32, #tpu.memory_space<any>>, %arg9: memref<8x2x!tpu.dma_semaphore, #tpu.memory_space<semaphore_mem>>) attributes {dimension_semantics = [#tpu.dimension_semantics<arbitrary>], iteration_bounds = array<i64: 1>, scalar_prefetch = 2 : i64, scratch_operands = 1 : i64, tpu.core_type = #tpu.core_type<tc>, window_params = [{}, {}, {}, {}, {}, {}]} {
    %c0 = arith.constant 0 : index
    %0 = memref.load %arg2[%c0] : memref<1xi32, #tpu.memory_space<smem>>
    %c0_i32 = arith.constant 0 : i32
    %1 = arith.cmpi ne, %0, %c0_i32 : i32
    %2 = arith.extui %1 : i1 to i32
    %c0_i32_0 = arith.constant 0 : i32
    %3 = arith.cmpi ne, %2, %c0_i32_0 : i32
    scf.if %3 {
      %c0_2 = arith.constant 0 : index
      %7 = memref.load %arg1[%c0_2] : memref<4xi32, #tpu.memory_space<smem>>
      %c0_i32_3 = arith.constant 0 : i32
      %c0_i32_4 = arith.constant 0 : i32
      %c0_i32_5 = arith.constant 0 : i32
      %c0_i32_6 = arith.constant 0 : i32
      %8 = tpu.memref_slice %arg7[%c0_i32_5, %7, %c0_i32_6] : memref<2x16x128xf32, #tpu.memory_space<any>> -> memref<2x4x128xf32, #tpu.memory_space<any>>
      %9 = tpu.memref_slice %arg9[%c0_i32_3, %c0_i32_4] : memref<8x2x!tpu.dma_semaphore, #tpu.memory_space<semaphore_mem>> -> memref<1x1x!tpu.dma_semaphore, #tpu.memory_space<semaphore_mem>>
      %10 = tpu.memref_squeeze %9 : memref<1x1x!tpu.dma_semaphore, #tpu.memory_space<semaphore_mem>> -> memref<!tpu.dma_semaphore, #tpu.memory_space<semaphore_mem>>
      tpu.enqueue_dma source(%arg5 : memref<2x4x128xf32, #tpu.memory_space<any>>) target(%8 : memref<2x4x128xf32, #tpu.memory_space<any>>) target_semaphore(%10 : memref<!tpu.dma_semaphore, #tpu.memory_space<semaphore_mem>>)
      %c0_i32_7 = arith.constant 0 : i32
      %c1_i32 = arith.constant 1 : i32
      %c0_i32_8 = arith.constant 0 : i32
      %c0_i32_9 = arith.constant 0 : i32
      %11 = tpu.memref_slice %arg8[%c0_i32_8, %7, %c0_i32_9] : memref<2x16x128xf32, #tpu.memory_space<any>> -> memref<2x4x128xf32, #tpu.memory_space<any>>
      %12 = tpu.memref_slice %arg9[%c0_i32_7, %c1_i32] : memref<8x2x!tpu.dma_semaphore, #tpu.memory_space<semaphore_mem>> -> memref<1x1x!tpu.dma_semaphore, #tpu.memory_space<semaphore_mem>>
      %13 = tpu.memref_squeeze %12 : memref<1x1x!tpu.dma_semaphore, #tpu.memory_space<semaphore_mem>> -> memref<!tpu.dma_semaphore, #tpu.memory_space<semaphore_mem>>
      tpu.enqueue_dma source(%arg6 : memref<2x4x128xf32, #tpu.memory_space<any>>) target(%11 : memref<2x4x128xf32, #tpu.memory_space<any>>) target_semaphore(%13 : memref<!tpu.dma_semaphore, #tpu.memory_space<semaphore_mem>>)
      %c0_i32_10 = arith.constant 0 : i32
      %c0_i32_11 = arith.constant 0 : i32
      %c0_i32_12 = arith.constant 0 : i32
      %c0_i32_13 = arith.constant 0 : i32
      %14 = tpu.memref_slice %arg7[%c0_i32_12, %7, %c0_i32_13] : memref<2x16x128xf32, #tpu.memory_space<any>> -> memref<2x4x128xf32, #tpu.memory_space<any>>
      %15 = tpu.memref_slice %arg9[%c0_i32_10, %c0_i32_11] : memref<8x2x!tpu.dma_semaphore, #tpu.memory_space<semaphore_mem>> -> memref<1x1x!tpu.dma_semaphore, #tpu.memory_space<semaphore_mem>>
      %16 = tpu.memref_squeeze %15 : memref<1x1x!tpu.dma_semaphore, #tpu.memory_space<semaphore_mem>> -> memref<!tpu.dma_semaphore, #tpu.memory_space<semaphore_mem>>
      tpu.wait_dma2 semaphore(%16 : memref<!tpu.dma_semaphore, #tpu.memory_space<semaphore_mem>>) src(%arg5 : memref<2x4x128xf32, #tpu.memory_space<any>>) dst(%14 : memref<2x4x128xf32, #tpu.memory_space<any>>)
      %c0_i32_14 = arith.constant 0 : i32
      %c1_i32_15 = arith.constant 1 : i32
      %c0_i32_16 = arith.constant 0 : i32
      %c0_i32_17 = arith.constant 0 : i32
      %17 = tpu.memref_slice %arg8[%c0_i32_16, %7, %c0_i32_17] : memref<2x16x128xf32, #tpu.memory_space<any>> -> memref<2x4x128xf32, #tpu.memory_space<any>>
      %18 = tpu.memref_slice %arg9[%c0_i32_14, %c1_i32_15] : memref<8x2x!tpu.dma_semaphore, #tpu.memory_space<semaphore_mem>> -> memref<1x1x!tpu.dma_semaphore, #tpu.memory_space<semaphore_mem>>
      %19 = tpu.memref_squeeze %18 : memref<1x1x!tpu.dma_semaphore, #tpu.memory_space<semaphore_mem>> -> memref<!tpu.dma_semaphore, #tpu.memory_space<semaphore_mem>>
      tpu.wait_dma2 semaphore(%19 : memref<!tpu.dma_semaphore, #tpu.memory_space<semaphore_mem>>) src(%arg6 : memref<2x4x128xf32, #tpu.memory_space<any>>) dst(%17 : memref<2x4x128xf32, #tpu.memory_space<any>>)
    } else {
    }
    %true = arith.constant true
    %4 = arith.xori %1, %true : i1
    %5 = arith.extui %4 : i1 to i32
    %c0_i32_1 = arith.constant 0 : i32
    %6 = arith.cmpi ne, %5, %c0_i32_1 : i32
    scf.if %6 {
      %c0_i32_2 = arith.constant 0 : i32
      %c4_i32 = arith.constant 4 : i32
      %7 = arith.addi %c0_i32_2, %c4_i32 : i32
      %c1_i32 = arith.constant 1 : i32
      scf.for %arg10 = %c0_i32_2 to %7 step %c1_i32  : i32 {
        %c1_i32_8 = arith.constant 1 : i32
        %9 = arith.muli %arg10, %c1_i32_8 : i32
        %c0_i32_9 = arith.constant 0 : i32
        %10 = arith.addi %c0_i32_9, %9 : i32
        %c7_i32 = arith.constant 7 : i32
        %11 = arith.andi %10, %c7_i32 : i32
        %12 = arith.index_cast %10 : i32 to index
        %13 = memref.load %arg1[%12] : memref<4xi32, #tpu.memory_space<smem>>
        %c0_i32_10 = arith.constant 0 : i32
        %c0_i32_11 = arith.constant 0 : i32
        %c0_i32_12 = arith.constant 0 : i32
        %14 = tpu.memref_slice %arg5[%c0_i32_11, %10, %c0_i32_12] : memref<2x4x128xf32, #tpu.memory_space<any>> -> memref<2x1x128xf32, #tpu.memory_space<any>>
        %c0_i32_13 = arith.constant 0 : i32
        %c0_i32_14 = arith.constant 0 : i32
        %15 = tpu.memref_slice %arg7[%c0_i32_13, %13, %c0_i32_14] : memref<2x16x128xf32, #tpu.memory_space<any>> -> memref<2x1x128xf32, #tpu.memory_space<any>>
        %16 = tpu.memref_slice %arg9[%11, %c0_i32_10] : memref<8x2x!tpu.dma_semaphore, #tpu.memory_space<semaphore_mem>> -> memref<1x1x!tpu.dma_semaphore, #tpu.memory_space<semaphore_mem>>
        %17 = tpu.memref_squeeze %16 : memref<1x1x!tpu.dma_semaphore, #tpu.memory_space<semaphore_mem>> -> memref<!tpu.dma_semaphore, #tpu.memory_space<semaphore_mem>>
        tpu.enqueue_dma source(%14 : memref<2x1x128xf32, #tpu.memory_space<any>>) target(%15 : memref<2x1x128xf32, #tpu.memory_space<any>>) target_semaphore(%17 : memref<!tpu.dma_semaphore, #tpu.memory_space<semaphore_mem>>)
        %c1_i32_15 = arith.constant 1 : i32
        %c0_i32_16 = arith.constant 0 : i32
        %c0_i32_17 = arith.constant 0 : i32
        %18 = tpu.memref_slice %arg6[%c0_i32_16, %10, %c0_i32_17] : memref<2x4x128xf32, #tpu.memory_space<any>> -> memref<2x1x128xf32, #tpu.memory_space<any>>
        %c0_i32_18 = arith.constant 0 : i32
        %c0_i32_19 = arith.constant 0 : i32
        %19 = tpu.memref_slice %arg8[%c0_i32_18, %13, %c0_i32_19] : memref<2x16x128xf32, #tpu.memory_space<any>> -> memref<2x1x128xf32, #tpu.memory_space<any>>
        %20 = tpu.memref_slice %arg9[%11, %c1_i32_15] : memref<8x2x!tpu.dma_semaphore, #tpu.memory_space<semaphore_mem>> -> memref<1x1x!tpu.dma_semaphore, #tpu.memory_space<semaphore_mem>>
        %21 = tpu.memref_squeeze %20 : memref<1x1x!tpu.dma_semaphore, #tpu.memory_space<semaphore_mem>> -> memref<!tpu.dma_semaphore, #tpu.memory_space<semaphore_mem>>
        tpu.enqueue_dma source(%18 : memref<2x1x128xf32, #tpu.memory_space<any>>) target(%19 : memref<2x1x128xf32, #tpu.memory_space<any>>) target_semaphore(%21 : memref<!tpu.dma_semaphore, #tpu.memory_space<semaphore_mem>>)
      }
      %c4_i32_3 = arith.constant 4 : i32
      %c0_i32_4 = arith.constant 0 : i32
      %c4_i32_5 = arith.constant 4 : i32
      %8 = arith.addi %c0_i32_4, %c4_i32_5 : i32
      %c1_i32_6 = arith.constant 1 : i32
      scf.for %arg10 = %c0_i32_4 to %8 step %c1_i32_6  : i32 {
        %c1_i32_8 = arith.constant 1 : i32
        %9 = arith.muli %arg10, %c1_i32_8 : i32
        %c0_i32_9 = arith.constant 0 : i32
        %10 = arith.addi %c0_i32_9, %9 : i32
        %c7_i32 = arith.constant 7 : i32
        %11 = arith.andi %10, %c7_i32 : i32
        %c0_i32_10 = arith.constant 0 : i32
        %c0_i32_11 = arith.constant 0 : i32
        %c0_i32_12 = arith.constant 0 : i32
        %c0_i32_13 = arith.constant 0 : i32
        %12 = tpu.memref_slice %arg5[%c0_i32_11, %c0_i32_12, %c0_i32_13] : memref<2x4x128xf32, #tpu.memory_space<any>> -> memref<2x1x128xf32, #tpu.memory_space<any>>
        %c0_i32_14 = arith.constant 0 : i32
        %c0_i32_15 = arith.constant 0 : i32
        %c0_i32_16 = arith.constant 0 : i32
        %13 = tpu.memref_slice %arg7[%c0_i32_14, %c0_i32_15, %c0_i32_16] : memref<2x16x128xf32, #tpu.memory_space<any>> -> memref<2x1x128xf32, #tpu.memory_space<any>>
        %14 = tpu.memref_slice %arg9[%11, %c0_i32_10] : memref<8x2x!tpu.dma_semaphore, #tpu.memory_space<semaphore_mem>> -> memref<1x1x!tpu.dma_semaphore, #tpu.memory_space<semaphore_mem>>
        %15 = tpu.memref_squeeze %14 : memref<1x1x!tpu.dma_semaphore, #tpu.memory_space<semaphore_mem>> -> memref<!tpu.dma_semaphore, #tpu.memory_space<semaphore_mem>>
        tpu.wait_dma2 semaphore(%15 : memref<!tpu.dma_semaphore, #tpu.memory_space<semaphore_mem>>) src(%12 : memref<2x1x128xf32, #tpu.memory_space<any>>) dst(%13 : memref<2x1x128xf32, #tpu.memory_space<any>>)
        %c1_i32_17 = arith.constant 1 : i32
        %c0_i32_18 = arith.constant 0 : i32
        %c0_i32_19 = arith.constant 0 : i32
        %c0_i32_20 = arith.constant 0 : i32
        %16 = tpu.memref_slice %arg6[%c0_i32_18, %c0_i32_19, %c0_i32_20] : memref<2x4x128xf32, #tpu.memory_space<any>> -> memref<2x1x128xf32, #tpu.memory_space<any>>
        %c0_i32_21 = arith.constant 0 : i32
        %c0_i32_22 = arith.constant 0 : i32
        %c0_i32_23 = arith.constant 0 : i32
        %17 = tpu.memref_slice %arg8[%c0_i32_21, %c0_i32_22, %c0_i32_23] : memref<2x16x128xf32, #tpu.memory_space<any>> -> memref<2x1x128xf32, #tpu.memory_space<any>>
        %18 = tpu.memref_slice %arg9[%11, %c1_i32_17] : memref<8x2x!tpu.dma_semaphore, #tpu.memory_space<semaphore_mem>> -> memref<1x1x!tpu.dma_semaphore, #tpu.memory_space<semaphore_mem>>
        %19 = tpu.memref_squeeze %18 : memref<1x1x!tpu.dma_semaphore, #tpu.memory_space<semaphore_mem>> -> memref<!tpu.dma_semaphore, #tpu.memory_space<semaphore_mem>>
        tpu.wait_dma2 semaphore(%19 : memref<!tpu.dma_semaphore, #tpu.memory_space<semaphore_mem>>) src(%16 : memref<2x1x128xf32, #tpu.memory_space<any>>) dst(%17 : memref<2x1x128xf32, #tpu.memory_space<any>>)
      }
      %c4_i32_7 = arith.constant 4 : i32
    } else {
    }
    return
  }
}

</mosaic_0001>

<llo_original>
// kernel: kv_cache_update.1
$region0: #{kv_cache_update.1}
  #allocation0 [shape = 'u32[]', space=smem, size = 0x4, offset = 0x4, fixed_abs, tag = 'smem constant byte address 0x4 - core index']
  #allocation1 [shape = 'u32[144,128]{1,0:T(1,128)}', space=vmem, size = 0x12000, scoped, tag = 'internal scratch']
  #allocation2 [shape = 's32[16]{0}', space=sflag, size = 0x40, scoped, tag = 'scratch operand']
  #allocation3 [shape = 's32[1]{0}', space=sflag, size = 0x4, scoped, tag = 'scoped memory for kv_cache_update.1']
  #allocation4 [shape = 'u8[512]{0}', space=smem, size = 0x200, scoped, tag = 'prefetched SMEM operand 0']
  #allocation5 [shape = 's32[1]{0:T(128)S(6)}', space=smem, size = 0x200, scoped, tag = 'prefetched SMEM operand 1']
  #allocation6 [shape = 's32[]', space=sflag, size = 0x4, offset = 0, fixed_abs, tag = 'sflag constant byte address 0x0 - dummy sync flag']
  #allocation7 [shape = 's32[]', space=sflag, size = 0x4, offset = 0, fixed_abs, tag = 'sflag constant byte address 0x0 - dummy sync flag']
  #allocation8 [shape = 's32[]', space=sflag, size = 0x4, offset = 0, fixed_abs, tag = 'sflag constant byte address 0x0 - dummy sync flag']
  #allocation9 [shape = 's32[]', space=sflag, size = 0x4, offset = 0, fixed_abs, tag = 'sflag constant byte address 0x0 - dummy sync flag']
  %s0 = inlined_call_operand.vmem [shape: s32[4], index: 0, kind: input, shape index: {}]
  %s1 = inlined_call_operand.<no memory space> [shape: s32[1], index: 1, kind: input, shape index: {}]
  %s2 = inlined_call_operand.vmem [shape: f32[2,16,128], index: 2, kind: input, shape index: {}, may-alias: {2,6}]
  %s3 = inlined_call_operand.vmem [shape: f32[2,16,128], index: 3, kind: input, shape index: {}, may-alias: {3,7}]
  %s4 = inlined_call_operand.vmem [shape: f32[2,4,128], index: 4, kind: input, shape index: {}]
  %s5 = inlined_call_operand.vmem [shape: f32[2,4,128], index: 5, kind: input, shape index: {}]
  %s6 = inlined_call_operand.vmem [shape: f32[2,16,128], index: 6, kind: output, shape index: {0}, may-alias: {2,6}]
  %s7 = inlined_call_operand.vmem [shape: f32[2,16,128], index: 7, kind: output, shape index: {1}, may-alias: {3,7}]
  %8 = xla_tuple %s6, %s7
  %s9 = sld [smem:[#allocation0]]
  $region158: #{kv_cache_update.1} parent=0
    _
  %s11 = ssub.s32 1, %s9
  %s12 = scalar_select 0, %s11, %s9
  %s13 = sshll.u32 %s0, 4
  %s14 = int_to_ptr.vmem [resolvable:$true] %s13
  %16 = dma.vmem_to_smem %s14, 16, [#allocation4], [#allocation3]
  %17 = sst [smem:[#allocation5]] %s1
  %18 = dma.done [#allocation3], 16
  %19 = sfence
  %s20 = sld [smem:[#allocation5]]
  %p21 = scmp.ne.s32.totalorder %s20, 0
  // Predicated region
  $region2: #{kv_cache_update.1} parent=0 // pred_check
    %p22 = pneg %p21
  $region3: #{kv_cache_update.1} parent=0 // pred_check_branch
    %24 = sbr.rel (%p22) target = $region5
  $region4: #{kv_cache_update.1} parent=0 // pred_region
    %s25 = sld [smem:[#allocation4]]
    %s26 = scalar_lea.vmem %s6, %s25
    %p28 = scmp.lt.u32.totalorder 4, 8
    %p29 = pneg %p28
    // Predicated region
    $region6: #{kv_cache_update.1} parent=4 // pred_check
      _
    $region7: #{kv_cache_update.1} parent=4 // pred_check_branch
      %31 = sbr.rel (%p28) target = $region9
    $region8: #{kv_cache_update.1} parent=4 // pred_region
      %s48 = sand.u32 4, 7
      %p49 = scmp.eq.s32.totalorder %s48, 0
      %p50 = pneg %p49
      // Predicated region
      $region21: #{kv_cache_update.1} parent=8 // pred_check
        _
      $region22: #{kv_cache_update.1} parent=8 // pred_check_branch
        %52 = sbr.rel (%p49) target = $region24
      $region23: #{kv_cache_update.1} parent=8 // pred_region
        %s53 = sand.u32 4, 7
        %s54 = ssub.s32 4, %s53
        %s55 = scalar_lea.vmem %s4, %s54
        %s56 = ssub.s32 4, %s53
        %s57 = scalar_lea.vmem %s26, %s56
        loop: start=0, step=1, limit=1
        $region25: #{kv_cache_update.1} parent=23 // loop_pre_header
          _
        $region26: #{kv_cache_update.1} parent=23 // loop_header
          %s59 = sphi 0, %s63
          %p60 = scmp.ge.s32.totalorder %s59, 1
          %s64 = sphi %s4, %s4
          %s65 = sphi %s26, %s26
        $region27: #{kv_cache_update.1} parent=23 // loop_header_branch
          %62 = sbr.rel (%p60) target = $region31
        $region28: #{kv_cache_update.1} parent=23 // loop_body
          _
        $region29: #{kv_cache_update.1} parent=23 // loop_footer
          %s63 = sadd.s32 1, %s59
        $region30: #{kv_cache_update.1} parent=23 // loop_footer_branch
          %58 = sbr.rel target = $region26
        $region31: #{kv_cache_update.1} parent=23 // loop_exit
          _
        %s66 = sshllo.u32 0, %s53
        loop: start=0, step=1, limit=1
        $region32: #{kv_cache_update.1} parent=23 // loop_pre_header
          _
        $region33: #{kv_cache_update.1} parent=23 // loop_header
          %s68 = sphi 0, %s72
          %p69 = scmp.ge.s32.totalorder %s68, 1
          %s73 = sphi %s55, %s55
          %s74 = sphi %s57, %s57
        $region34: #{kv_cache_update.1} parent=23 // loop_header_branch
          %71 = sbr.rel (%p69) target = $region38
        $region35: #{kv_cache_update.1} parent=23 // loop_body
          %v75 = vld [vmem:[%s73] sm:%s66]
          %76 = vst [vmem:[%s74] sm:%s66] %v75
          %v77 = vld [vmem:[%s73 + $0x4] sm:%s66]
          %78 = vst [vmem:[%s74 + $0x10] sm:%s66] %v77
        $region36: #{kv_cache_update.1} parent=23 // loop_footer
          %s72 = sadd.s32 1, %s68
        $region37: #{kv_cache_update.1} parent=23 // loop_footer_branch
          %67 = sbr.rel target = $region33
        $region38: #{kv_cache_update.1} parent=23 // loop_exit
          _
      $region24: #{kv_cache_update.1} parent=8 // pred_fallthru
        _
    $region9: #{kv_cache_update.1} parent=4 // pred_fallthru
      _
    // Predicated region
    $region10: #{kv_cache_update.1} parent=4 // pred_check
      %p32 = pneg %p28
    $region11: #{kv_cache_update.1} parent=4 // pred_check_branch
      %34 = sbr.rel (%p32) target = $region13
    $region12: #{kv_cache_update.1} parent=4 // pred_region
      %s35 = sshllo.u32 0, 4
      loop: start=0, step=1, limit=1
      $region14: #{kv_cache_update.1} parent=12 // loop_pre_header
        _
      $region15: #{kv_cache_update.1} parent=12 // loop_header
        %s37 = sphi 0, %s41
        %p38 = scmp.ge.s32.totalorder %s37, 1
        %s42 = sphi %s4, %s4
        %s43 = sphi %s26, %s26
      $region16: #{kv_cache_update.1} parent=12 // loop_header_branch
        %40 = sbr.rel (%p38) target = $region20
      $region17: #{kv_cache_update.1} parent=12 // loop_body
        %v44 = vld [vmem:[%s42] sm:%s35]
        %45 = vst [vmem:[%s43] sm:%s35] %v44
        %v46 = vld [vmem:[%s42 + $0x4] sm:%s35]
        %47 = vst [vmem:[%s43 + $0x10] sm:%s35] %v46
      $region18: #{kv_cache_update.1} parent=12 // loop_footer
        %s41 = sadd.s32 1, %s37
      $region19: #{kv_cache_update.1} parent=12 // loop_footer_branch
        %36 = sbr.rel target = $region15
      $region20: #{kv_cache_update.1} parent=12 // loop_exit
        _
    $region13: #{kv_cache_update.1} parent=4 // pred_fallthru
      _
    // Predicated region
    $region39: #{kv_cache_update.1} parent=4 // pred_check
      _
    $region40: #{kv_cache_update.1} parent=4 // pred_check_branch
      %81 = sbr.rel (0) target = $region42
    $region41: #{kv_cache_update.1} parent=4 // pred_region
      %82 = vsyncadd [#allocation2], 128
    $region42: #{kv_cache_update.1} parent=4 // pred_fallthru
      _
    %s83 = scalar_lea.vmem %s7, %s25
    %s84 = scalar_lea.sflag [#allocation2], 1
    %p86 = scmp.lt.u32.totalorder 4, 8
    %p87 = pneg %p86
    // Predicated region
    $region43: #{kv_cache_update.1} parent=4 // pred_check
      _
    $region44: #{kv_cache_update.1} parent=4 // pred_check_branch
      %89 = sbr.rel (%p86) target = $region46
    $region45: #{kv_cache_update.1} parent=4 // pred_region
      %s106 = sand.u32 4, 7
      %p107 = scmp.eq.s32.totalorder %s106, 0
      %p108 = pneg %p107
      // Predicated region
      $region58: #{kv_cache_update.1} parent=45 // pred_check
        _
      $region59: #{kv_cache_update.1} parent=45 // pred_check_branch
        %110 = sbr.rel (%p107) target = $region61
      $region60: #{kv_cache_update.1} parent=45 // pred_region
        %s111 = sand.u32 4, 7
        %s112 = ssub.s32 4, %s111
        %s113 = scalar_lea.vmem %s5, %s112
        %s114 = ssub.s32 4, %s111
        %s115 = scalar_lea.vmem %s83, %s114
        loop: start=0, step=1, limit=1
        $region62: #{kv_cache_update.1} parent=60 // loop_pre_header
          _
        $region63: #{kv_cache_update.1} parent=60 // loop_header
          %s117 = sphi 0, %s121
          %p118 = scmp.ge.s32.totalorder %s117, 1
          %s122 = sphi %s5, %s5
          %s123 = sphi %s83, %s83
        $region64: #{kv_cache_update.1} parent=60 // loop_header_branch
          %120 = sbr.rel (%p118) target = $region68
        $region65: #{kv_cache_update.1} parent=60 // loop_body
          _
        $region66: #{kv_cache_update.1} parent=60 // loop_footer
          %s121 = sadd.s32 1, %s117
        $region67: #{kv_cache_update.1} parent=60 // loop_footer_branch
          %116 = sbr.rel target = $region63
        $region68: #{kv_cache_update.1} parent=60 // loop_exit
          _
        %s124 = sshllo.u32 0, %s111
        loop: start=0, step=1, limit=1
        $region69: #{kv_cache_update.1} parent=60 // loop_pre_header
          _
        $region70: #{kv_cache_update.1} parent=60 // loop_header
          %s126 = sphi 0, %s130
          %p127 = scmp.ge.s32.totalorder %s126, 1
          %s131 = sphi %s113, %s113
          %s132 = sphi %s115, %s115
        $region71: #{kv_cache_update.1} parent=60 // loop_header_branch
          %129 = sbr.rel (%p127) target = $region75
        $region72: #{kv_cache_update.1} parent=60 // loop_body
          %v133 = vld [vmem:[%s131] sm:%s124]
          %134 = vst [vmem:[%s132] sm:%s124] %v133
          %v135 = vld [vmem:[%s131 + $0x4] sm:%s124]
          %136 = vst [vmem:[%s132 + $0x10] sm:%s124] %v135
        $region73: #{kv_cache_update.1} parent=60 // loop_footer
          %s130 = sadd.s32 1, %s126
        $region74: #{kv_cache_update.1} parent=60 // loop_footer_branch
          %125 = sbr.rel target = $region70
        $region75: #{kv_cache_update.1} parent=60 // loop_exit
          _
      $region61: #{kv_cache_update.1} parent=45 // pred_fallthru
        _
    $region46: #{kv_cache_update.1} parent=4 // pred_fallthru
      _
    // Predicated region
    $region47: #{kv_cache_update.1} parent=4 // pred_check
      %p90 = pneg %p86
    $region48: #{kv_cache_update.1} parent=4 // pred_check_branch
      %92 = sbr.rel (%p90) target = $region50
    $region49: #{kv_cache_update.1} parent=4 // pred_region
      %s93 = sshllo.u32 0, 4
      loop: start=0, step=1, limit=1
      $region51: #{kv_cache_update.1} parent=49 // loop_pre_header
        _
      $region52: #{kv_cache_update.1} parent=49 // loop_header
        %s95 = sphi 0, %s99
        %p96 = scmp.ge.s32.totalorder %s95, 1
        %s100 = sphi %s5, %s5
        %s101 = sphi %s83, %s83
      $region53: #{kv_cache_update.1} parent=49 // loop_header_branch
        %98 = sbr.rel (%p96) target = $region57
      $region54: #{kv_cache_update.1} parent=49 // loop_body
        %v102 = vld [vmem:[%s100] sm:%s93]
        %103 = vst [vmem:[%s101] sm:%s93] %v102
        %v104 = vld [vmem:[%s100 + $0x4] sm:%s93]
        %105 = vst [vmem:[%s101 + $0x10] sm:%s93] %v104
      $region55: #{kv_cache_update.1} parent=49 // loop_footer
        %s99 = sadd.s32 1, %s95
      $region56: #{kv_cache_update.1} parent=49 // loop_footer_branch
        %94 = sbr.rel target = $region52
      $region57: #{kv_cache_update.1} parent=49 // loop_exit
        _
    $region50: #{kv_cache_update.1} parent=4 // pred_fallthru
      _
    // Predicated region
    $region76: #{kv_cache_update.1} parent=4 // pred_check
      _
    $region77: #{kv_cache_update.1} parent=4 // pred_check_branch
      %139 = sbr.rel (0) target = $region79
    $region78: #{kv_cache_update.1} parent=4 // pred_region
      %140 = vsyncadd %s84, 128
    $region79: #{kv_cache_update.1} parent=4 // pred_fallthru
      _
    %s141 = smul.u32 2, 4
    %s142 = smul.u32 %s141, 1
    %s143 = sshll.u32 %s142, 4
    %144 = dma.done [#allocation2], %s143
    %s145 = sshll.u32 %s142, 4
    %146 = dma.done %s84, %s145
  $region5: #{kv_cache_update.1} parent=0 // pred_fallthru
    _
  %p147 = scmp.eq.s32.totalorder %s20, 0
  // Predicated region
  $region80: #{kv_cache_update.1} parent=0 // pred_check
    %p148 = pneg %p147
  $region81: #{kv_cache_update.1} parent=0 // pred_check_branch
    %150 = sbr.rel (%p148) target = $region83
  $region82: #{kv_cache_update.1} parent=0 // pred_region
    loop: start=0, step=1, limit=4
    $region84: #{kv_cache_update.1} parent=82 // loop_pre_header
      _
    $region85: #{kv_cache_update.1} parent=82 // loop_header
      %s152 = sphi 0, %s156
      %p153 = scmp.ge.s32.totalorder %s152, 4
    $region86: #{kv_cache_update.1} parent=82 // loop_header_branch
      %155 = sbr.rel (%p153) target = $region90
    $region87: #{kv_cache_update.1} parent=82 // loop_body
      %s157 = sand.u32 %s152, 7
      %s158 = sld [smem:[#allocation4 + %s152]]
      %s159 = scalar_lea.vmem %s4, %s152
      %s160 = scalar_lea.vmem %s6, %s158
      %s161 = smul.u32 %s157, 2
      %s162 = scalar_lea.sflag [#allocation2], %s161
      %p164 = scmp.lt.u32.totalorder 1, 8
      %p165 = pneg %p164
      // Predicated region
      $region91: #{kv_cache_update.1} parent=87 // pred_check
        _
      $region92: #{kv_cache_update.1} parent=87 // pred_check_branch
        %167 = sbr.rel (%p164) target = $region94
      $region93: #{kv_cache_update.1} parent=87 // pred_region
        %s184 = sand.u32 1, 7
        %p185 = scmp.eq.s32.totalorder %s184, 0
        %p186 = pneg %p185
        // Predicated region
        $region106: #{kv_cache_update.1} parent=93 // pred_check
          _
        $region107: #{kv_cache_update.1} parent=93 // pred_check_branch
          %188 = sbr.rel (%p185) target = $region109
        $region108: #{kv_cache_update.1} parent=93 // pred_region
          %s189 = sand.u32 1, 7
          %s190 = ssub.s32 1, %s189
          %s191 = scalar_lea.vmem %s159, %s190
          %s192 = ssub.s32 1, %s189
          %s193 = scalar_lea.vmem %s160, %s192
          %s194 = sshllo.u32 0, %s189
          loop: start=0, step=1, limit=1
          $region110: #{kv_cache_update.1} parent=108 // loop_pre_header
            _
          $region111: #{kv_cache_update.1} parent=108 // loop_header
            %s196 = sphi 0, %s200
            %p197 = scmp.ge.s32.totalorder %s196, 1
            %s201 = sphi %s191, %s191
            %s202 = sphi %s193, %s193
          $region112: #{kv_cache_update.1} parent=108 // loop_header_branch
            %199 = sbr.rel (%p197) target = $region116
          $region113: #{kv_cache_update.1} parent=108 // loop_body
            %v203 = vld [vmem:[%s201] sm:%s194]
            %204 = vst [vmem:[%s202] sm:%s194] %v203
            %v205 = vld [vmem:[%s201 + $0x4] sm:%s194]
            %206 = vst [vmem:[%s202 + $0x10] sm:%s194] %v205
          $region114: #{kv_cache_update.1} parent=108 // loop_footer
            %s200 = sadd.s32 1, %s196
          $region115: #{kv_cache_update.1} parent=108 // loop_footer_branch
            %195 = sbr.rel target = $region111
          $region116: #{kv_cache_update.1} parent=108 // loop_exit
            _
        $region109: #{kv_cache_update.1} parent=93 // pred_fallthru
          _
      $region94: #{kv_cache_update.1} parent=87 // pred_fallthru
        _
      // Predicated region
      $region95: #{kv_cache_update.1} parent=87 // pred_check
        %p168 = pneg %p164
      $region96: #{kv_cache_update.1} parent=87 // pred_check_branch
        %170 = sbr.rel (%p168) target = $region98
      $region97: #{kv_cache_update.1} parent=87 // pred_region
        %s171 = sshllo.u32 0, 1
        loop: start=0, step=1, limit=1
        $region99: #{kv_cache_update.1} parent=97 // loop_pre_header
          _
        $region100: #{kv_cache_update.1} parent=97 // loop_header
          %s173 = sphi 0, %s177
          %p174 = scmp.ge.s32.totalorder %s173, 1
          %s178 = sphi %s159, %s159
          %s179 = sphi %s160, %s160
        $region101: #{kv_cache_update.1} parent=97 // loop_header_branch
          %176 = sbr.rel (%p174) target = $region105
        $region102: #{kv_cache_update.1} parent=97 // loop_body
          %v180 = vld [vmem:[%s178] sm:%s171]
          %181 = vst [vmem:[%s179] sm:%s171] %v180
          %v182 = vld [vmem:[%s178 + $0x4] sm:%s171]
          %183 = vst [vmem:[%s179 + $0x10] sm:%s171] %v182
        $region103: #{kv_cache_update.1} parent=97 // loop_footer
          %s177 = sadd.s32 1, %s173
        $region104: #{kv_cache_update.1} parent=97 // loop_footer_branch
          %172 = sbr.rel target = $region100
        $region105: #{kv_cache_update.1} parent=97 // loop_exit
          _
      $region98: #{kv_cache_update.1} parent=87 // pred_fallthru
        _
      // Predicated region
      $region117: #{kv_cache_update.1} parent=87 // pred_check
        _
      $region118: #{kv_cache_update.1} parent=87 // pred_check_branch
        %209 = sbr.rel (0) target = $region120
      $region119: #{kv_cache_update.1} parent=87 // pred_region
        %210 = vsyncadd %s162, 32
      $region120: #{kv_cache_update.1} parent=87 // pred_fallthru
        _
      %s211 = scalar_lea.vmem %s5, %s152
      %s212 = scalar_lea.vmem %s7, %s158
      %s213 = sadd.s32 1, %s161
      %s214 = scalar_lea.sflag [#allocation2], %s213
      %p216 = scmp.lt.u32.totalorder 1, 8
      %p217 = pneg %p216
      // Predicated region
      $region121: #{kv_cache_update.1} parent=87 // pred_check
        _
      $region122: #{kv_cache_update.1} parent=87 // pred_check_branch
        %219 = sbr.rel (%p216) target = $region124
      $region123: #{kv_cache_update.1} parent=87 // pred_region
        %s236 = sand.u32 1, 7
        %p237 = scmp.eq.s32.totalorder %s236, 0
        %p238 = pneg %p237
        // Predicated region
        $region136: #{kv_cache_update.1} parent=123 // pred_check
          _
        $region137: #{kv_cache_update.1} parent=123 // pred_check_branch
          %240 = sbr.rel (%p237) target = $region139
        $region138: #{kv_cache_update.1} parent=123 // pred_region
          %s241 = sand.u32 1, 7
          %s242 = ssub.s32 1, %s241
          %s243 = scalar_lea.vmem %s211, %s242
          %s244 = ssub.s32 1, %s241
          %s245 = scalar_lea.vmem %s212, %s244
          %s246 = sshllo.u32 0, %s241
          loop: start=0, step=1, limit=1
          $region140: #{kv_cache_update.1} parent=138 // loop_pre_header
            _
          $region141: #{kv_cache_update.1} parent=138 // loop_header
            %s248 = sphi 0, %s252
            %p249 = scmp.ge.s32.totalorder %s248, 1
            %s253 = sphi %s243, %s243
            %s254 = sphi %s245, %s245
          $region142: #{kv_cache_update.1} parent=138 // loop_header_branch
            %251 = sbr.rel (%p249) target = $region146
          $region143: #{kv_cache_update.1} parent=138 // loop_body
            %v255 = vld [vmem:[%s253] sm:%s246]
            %256 = vst [vmem:[%s254] sm:%s246] %v255
            %v257 = vld [vmem:[%s253 + $0x4] sm:%s246]
            %258 = vst [vmem:[%s254 + $0x10] sm:%s246] %v257
          $region144: #{kv_cache_update.1} parent=138 // loop_footer
            %s252 = sadd.s32 1, %s248
          $region145: #{kv_cache_update.1} parent=138 // loop_footer_branch
            %247 = sbr.rel target = $region141
          $region146: #{kv_cache_update.1} parent=138 // loop_exit
            _
        $region139: #{kv_cache_update.1} parent=123 // pred_fallthru
          _
      $region124: #{kv_cache_update.1} parent=87 // pred_fallthru
        _
      // Predicated region
      $region125: #{kv_cache_update.1} parent=87 // pred_check
        %p220 = pneg %p216
      $region126: #{kv_cache_update.1} parent=87 // pred_check_branch
        %222 = sbr.rel (%p220) target = $region128
      $region127: #{kv_cache_update.1} parent=87 // pred_region
        %s223 = sshllo.u32 0, 1
        loop: start=0, step=1, limit=1
        $region129: #{kv_cache_update.1} parent=127 // loop_pre_header
          _
        $region130: #{kv_cache_update.1} parent=127 // loop_header
          %s225 = sphi 0, %s229
          %p226 = scmp.ge.s32.totalorder %s225, 1
          %s230 = sphi %s211, %s211
          %s231 = sphi %s212, %s212
        $region131: #{kv_cache_update.1} parent=127 // loop_header_branch
          %228 = sbr.rel (%p226) target = $region135
        $region132: #{kv_cache_update.1} parent=127 // loop_body
          %v232 = vld [vmem:[%s230] sm:%s223]
          %233 = vst [vmem:[%s231] sm:%s223] %v232
          %v234 = vld [vmem:[%s230 + $0x4] sm:%s223]
          %235 = vst [vmem:[%s231 + $0x10] sm:%s223] %v234
        $region133: #{kv_cache_update.1} parent=127 // loop_footer
          %s229 = sadd.s32 1, %s225
        $region134: #{kv_cache_update.1} parent=127 // loop_footer_branch
          %224 = sbr.rel target = $region130
        $region135: #{kv_cache_update.1} parent=127 // loop_exit
          _
      $region128: #{kv_cache_update.1} parent=87 // pred_fallthru
        _
      // Predicated region
      $region147: #{kv_cache_update.1} parent=87 // pred_check
        _
      $region148: #{kv_cache_update.1} parent=87 // pred_check_branch
        %261 = sbr.rel (0) target = $region150
      $region149: #{kv_cache_update.1} parent=87 // pred_region
        %262 = vsyncadd %s214, 32
      $region150: #{kv_cache_update.1} parent=87 // pred_fallthru
        _
    $region88: #{kv_cache_update.1} parent=82 // loop_footer
      %s156 = sadd.s32 1, %s152
    $region89: #{kv_cache_update.1} parent=82 // loop_footer_branch
      %151 = sbr.rel target = $region85
    $region90: #{kv_cache_update.1} parent=82 // loop_exit
      _
    loop: start=0, step=1, limit=4
    $region151: #{kv_cache_update.1} parent=82 // loop_pre_header
      _
    $region152: #{kv_cache_update.1} parent=82 // loop_header
      %s264 = sphi 0, %s268
      %p265 = scmp.ge.s32.totalorder %s264, 4
    $region153: #{kv_cache_update.1} parent=82 // loop_header_branch
      %267 = sbr.rel (%p265) target = $region157
    $region154: #{kv_cache_update.1} parent=82 // loop_body
      %s269 = sand.u32 %s264, 7
      %s270 = smul.u32 %s269, 2
      %s271 = scalar_lea.sflag [#allocation2], %s270
      %s272 = smul.u32 2, 1
      %s273 = smul.u32 %s272, 1
      %s274 = sshll.u32 %s273, 4
      %275 = dma.done %s271, %s274
      %s276 = sadd.s32 1, %s270
      %s277 = scalar_lea.sflag [#allocation2], %s276
      %s278 = sshll.u32 %s273, 4
      %279 = dma.done %s277, %s278
    $region155: #{kv_cache_update.1} parent=82 // loop_footer
      %s268 = sadd.s32 1, %s264
    $region156: #{kv_cache_update.1} parent=82 // loop_footer_branch
      %263 = sbr.rel target = $region152
    $region157: #{kv_cache_update.1} parent=82 // loop_exit
      _
  $region83: #{kv_cache_update.1} parent=0 // pred_fallthru
    _
  %280 = vsyncmov [#allocation2]
  %s281 = vpop.sfrf %280
  %p282 = scmp.eq.s32.totalorder %s281, 0
  %p283 = pneg %p282
  %285 = shalt.err (%p283)
  %s286 = scalar_lea.sflag [#allocation2], 1
  %287 = vsyncmov %s286
  %s288 = vpop.sfrf %287
  %p289 = scmp.eq.s32.totalorder %s288, 0
  %p290 = pneg %p289
  %292 = shalt.err (%p290)
  %s293 = scalar_lea.sflag [#allocation2], 2
  %294 = vsyncmov %s293
  %s295 = vpop.sfrf %294
  %p296 = scmp.eq.s32.totalorder %s295, 0
  %p297 = pneg %p296
  %299 = shalt.err (%p297)
  %s300 = scalar_lea.sflag [#allocation2], 3
  %301 = vsyncmov %s300
  %s302 = vpop.sfrf %301
  %p303 = scmp.eq.s32.totalorder %s302, 0
  %p304 = pneg %p303
  %306 = shalt.err (%p304)
  %s307 = scalar_lea.sflag [#allocation2], 4
  %308 = vsyncmov %s307
  %s309 = vpop.sfrf %308
  %p310 = scmp.eq.s32.totalorder %s309, 0
  %p311 = pneg %p310
  %313 = shalt.err (%p311)
  %s314 = scalar_lea.sflag [#allocation2], 5
  %315 = vsyncmov %s314
  %s316 = vpop.sfrf %315
  %p317 = scmp.eq.s32.totalorder %s316, 0
  %p318 = pneg %p317
  %320 = shalt.err (%p318)
  %s321 = scalar_lea.sflag [#allocation2], 6
  %322 = vsyncmov %s321
  %s323 = vpop.sfrf %322
  %p324 = scmp.eq.s32.totalorder %s323, 0
  %p325 = pneg %p324
  %327 = shalt.err (%p325)
  %s328 = scalar_lea.sflag [#allocation2], 7
  %329 = vsyncmov %s328
  %s330 = vpop.sfrf %329
  %p331 = scmp.eq.s32.totalorder %s330, 0
  %p332 = pneg %p331
  %334 = shalt.err (%p332)
  %s335 = scalar_lea.sflag [#allocation2], 8
  %336 = vsyncmov %s335
  %s337 = vpop.sfrf %336
  %p338 = scmp.eq.s32.totalorder %s337, 0
  %p339 = pneg %p338
  %341 = shalt.err (%p339)
  %s342 = scalar_lea.sflag [#allocation2], 9
  %343 = vsyncmov %s342
  %s344 = vpop.sfrf %343
  %p345 = scmp.eq.s32.totalorder %s344, 0
  %p346 = pneg %p345
  %348 = shalt.err (%p346)
  %s349 = scalar_lea.sflag [#allocation2], 10
  %350 = vsyncmov %s349
  %s351 = vpop.sfrf %350
  %p352 = scmp.eq.s32.totalorder %s351, 0
  %p353 = pneg %p352
  %355 = shalt.err (%p353)
  %s356 = scalar_lea.sflag [#allocation2], 11
  %357 = vsyncmov %s356
  %s358 = vpop.sfrf %357
  %p359 = scmp.eq.s32.totalorder %s358, 0
  %p360 = pneg %p359
  %362 = shalt.err (%p360)
  %s363 = scalar_lea.sflag [#allocation2], 12
  %364 = vsyncmov %s363
  %s365 = vpop.sfrf %364
  %p366 = scmp.eq.s32.totalorder %s365, 0
  %p367 = pneg %p366
  %369 = shalt.err (%p367)
  %s370 = scalar_lea.sflag [#allocation2], 13
  %371 = vsyncmov %s370
  %s372 = vpop.sfrf %371
  %p373 = scmp.eq.s32.totalorder %s372, 0
  %p374 = pneg %p373
  %376 = shalt.err (%p374)
  %s377 = scalar_lea.sflag [#allocation2], 14
  %378 = vsyncmov %s377
  %s379 = vpop.sfrf %378
  %p380 = scmp.eq.s32.totalorder %s379, 0
  %p381 = pneg %p380
  %383 = shalt.err (%p381)
  %s384 = scalar_lea.sflag [#allocation2], 15
  %385 = vsyncmov %s384
  %s386 = vpop.sfrf %385
  %p387 = scmp.eq.s32.totalorder %s386, 0
  %p388 = pneg %p387
  %390 = shalt.err (%p388)

</llo_original>
